<compile_context>
chip_gen: v7x
topology: tpu7x:2x2x1
jax: 0.10.0
libtpu: 0.0.40
codegen_flags: <defaults>
</compile_context>

<pallas_src>
import functools

import jax
import jax.numpy as jnp
from jax import lax
from jax.experimental import pallas as pl
from jax.experimental.pallas import tpu as pltpu

_UNROLL_T_MAX = 16  # fully unroll the recurrence up to this sequence length


def _round_up(x, m):
    return (x + m - 1) // m * m


def _default_mxu_dtype():
    """bf16 MXU operands on bf16-native chips (v6e / v7x), f32 elsewhere."""
    try:
        kind = jax.devices()[0].device_kind.lower()
    except Exception:
        return jnp.float32
    if "v6" in kind or "v7" in kind:
        return jnp.bfloat16
    return jnp.float32


def _lstm_head_kernel(x_ref, w_ih_ref, w_hh_ref, b_ref, w_lin_ref, b_lin_ref,
                      out_ref, gx_ref, *, hidden_units, seq_len, mxu_dtype):
    """One batch tile: full LSTM recurrence over T + ReLU + Linear head."""
    H = hidden_units
    T = seq_len
    Bt = x_ref.shape[1]          # x block is time-major: (T, Bt, F)
    F = x_ref.shape[2]
    cdt = mxu_dtype              # MXU operand dtype (f32 or bf16), f32 accumulation

    # ---- Lane constants (hoisted).  Gate order is i, f, g, o over 4H lanes. ----
    # sigmoid(x) = 0.5 * tanh(0.5 * x) + 0.5, so pre-scaling the i/f/o lanes by
    # 0.5 lets the whole (Bt, 4H) slab go through ONE tanh per step, recovered
    # by a VPU mul+add (act = tanh * scale + offs).
    lane_r = lax.broadcasted_iota(jnp.int32, (1, 4 * H), 1)
    is_g_r = (lane_r >= 2 * H) & (lane_r < 3 * H)
    scale_r = jnp.where(is_g_r, 1.0, 0.5)                 # (1, 4H) pre/post scale
    offs_r = jnp.where(is_g_r, 0.0, 0.5)                  # (1, 4H) post offset
    post_scale = jnp.broadcast_to(scale_r, (Bt, 4 * H))   # hoisted out of the loop
    offs = jnp.broadcast_to(offs_r, (Bt, 4 * H))

    # Fold the pre-scale into the weights / bias once (outside the recurrence).
    w_ih_s = (w_ih_ref[...] * scale_r).astype(cdt)        # (F, 4H)
    w_hh_s = (w_hh_ref[...] * scale_r).astype(cdt)        # (H, 4H), loop resident
    bias_s = b_ref[...] * scale_r                         # (1, 4H), f32

    # ---- Hoisted input projection: one GEMM over the whole (T, Bt) block. ----
    # TODO(synk): for production F >> 4, make F a multiple of 128 (or use VPU
    # broadcast-MACs); at F=4 the absolute cost of this one-time GEMM is tiny.
    x2d = x_ref[...].reshape(T * Bt, F).astype(cdt)
    gx = jnp.dot(x2d, w_ih_s, preferred_element_type=jnp.float32) + bias_s
    # Time-major scratch: gx_ref[t] is a contiguous (Bt, 4H) tile each step.
    gx_ref[...] = gx.reshape(T, Bt, 4 * H)

    h0 = jnp.zeros((Bt, H), jnp.float32)   # h0 = c0 = 0, as in the module
    c0 = jnp.zeros((Bt, H), jnp.float32)

    def step(t, carry):
        h, c = carry
        gates = gx_ref[t] + jnp.dot(h.astype(cdt), w_hh_s,
                                    preferred_element_type=jnp.float32)
        a = jnp.tanh(gates)                    # single EUP pass over (Bt, 4H)
        act = a * post_scale + offs            # sigmoid on i/f/o lanes, tanh on g
        i_g = act[:, 0 * H:1 * H]
        f_g = act[:, 1 * H:2 * H]
        g_g = act[:, 2 * H:3 * H]
        o_g = act[:, 3 * H:4 * H]
        c = f_g * c + i_g * g_g
        h = o_g * jnp.tanh(c)
        return h, c

    if T <= _UNROLL_T_MAX:
        # Small static T: full unroll gives the scheduler cross-step visibility.
        carry = (h0, c0)
        for t in range(T):
            carry = step(t, carry)
        h, _ = carry
    else:
        # Long sequences: bound live ranges / code size with a modest unroll.
        h, _ = lax.fori_loop(0, T, step, (h0, c0), unroll=2)

    # hn -> view(-1, H) -> ReLU -> Linear(H, 1).  Tiny output dim, so use a VPU
    # multiply + XLU cross-lane reduce (keeps the MXU free), f32 throughout.
    h_relu = jnp.maximum(h, 0.0)
    out_ref[...] = (jnp.sum(h_relu * w_lin_ref[...], axis=1, keepdims=True)
                    + b_lin_ref[0, 0])


def shallow_regression_lstm(x, params, *, batch_tile=256, mxu_dtype=None):
    """x: (B, T, F) float32, batch_first like the PyTorch module. Returns (B,)."""
    B, T, F = x.shape
    H = params["w_hh"].shape[0]
    if mxu_dtype is None:
        mxu_dtype = _default_mxu_dtype()

    # Batch tile: sublane-aligned, large by default (amortizes per-step MXU
    # fill/drain + grid overhead), and capped at ~ceil(B/2) so the batch grid
    # has >= 2 tiles whenever possible (both TensorCores on v7x via "parallel").
    two_tc_cap = _round_up(max(1, -(-B // 2)), 8)
    bt = max(8, min(_round_up(batch_tile, 8), two_tc_cap))
    B_pad = _round_up(B, bt)
    if B_pad != B:
        x = jnp.pad(x, ((0, B_pad - B), (0, 0), (0, 0)))
    xt = jnp.transpose(x, (1, 0, 2))            # time-major: (T, B_pad, F)

    w_lin_row = params["w_lin"].reshape(1, H)   # (1, H) row for the VPU head

    kernel = functools.partial(_lstm_head_kernel, hidden_units=H, seq_len=T,
                               mxu_dtype=mxu_dtype)

    out = pl.pallas_call(
        kernel,
        out_shape=jax.ShapeDtypeStruct((B_pad, 1), jnp.float32),
        grid=(B_pad // bt,),
        in_specs=[
            pl.BlockSpec((T, bt, F), lambda i: (0, i, 0)),      # x tile (time-major)
            pl.BlockSpec((F, 4 * H), lambda i: (0, 0)),         # w_ih (resident)
            pl.BlockSpec((H, 4 * H), lambda i: (0, 0)),         # w_hh (resident)
            pl.BlockSpec((1, 4 * H), lambda i: (0, 0)),         # bias
            pl.BlockSpec((1, H), lambda i: (0, 0)),             # w_lin row
            pl.BlockSpec((1, 1), lambda i: (0, 0),
                         memory_space=pltpu.MemorySpace.SMEM),  # b_lin scalar
        ],
        out_specs=pl.BlockSpec((bt, 1), lambda i: (i, 0)),
        scratch_shapes=[pltpu.VMEM((T, bt, 4 * H), jnp.float32)],  # time-major gates
        compiler_params=pltpu.CompilerParams(
            dimension_semantics=("parallel",)),
    )(xt, params["w_ih"], params["w_hh"], params["bias"],
      w_lin_row, params["b_lin"])

    return out[:B, 0]   # Linear(..., 1).flatten() -> (B,)


def init_params(key, num_features, hidden_units):
    """Deterministic init mirroring PyTorch's U(-1/sqrt(H), 1/sqrt(H))."""
    H, F = hidden_units, num_features
    k = 1.0 / jnp.sqrt(jnp.asarray(H, jnp.float32))
    keys = jax.random.split(key, 6)

    # PyTorch stores weight_ih as (4H, F); we keep the transposed (F, 4H).
    w_ih = jax.random.uniform(keys[0], (F, 4 * H), jnp.float32, -k, k)
    w_hh = jax.random.uniform(keys[1], (H, 4 * H), jnp.float32, -k, k)
    b_ih = jax.random.uniform(keys[2], (4 * H,), jnp.float32, -k, k)
    b_hh = jax.random.uniform(keys[3], (4 * H,), jnp.float32, -k, k)
    w_lin = jax.random.uniform(keys[4], (H, 1), jnp.float32, -k, k)
    b_lin = jax.random.uniform(keys[5], (1, 1), jnp.float32, -k, k)

    return {
        "w_ih": w_ih,
        "w_hh": w_hh,
        "bias": (b_ih + b_hh).reshape(1, 4 * H),
        "w_lin": w_lin,
        "b_lin": b_lin,
    }


def _reference(x, params):
    """Pure-JAX f32 reference of the same forward (sanity check)."""
    B, T, F = x.shape
    H = params["w_hh"].shape[0]
    h = jnp.zeros((B, H), jnp.float32)
    c = jnp.zeros((B, H), jnp.float32)

    def step(carry, x_t):
        h, c = carry
        gates = x_t @ params["w_ih"] + h @ params["w_hh"] + params["bias"]
        i_g = jax.nn.sigmoid(gates[:, 0 * H:1 * H])
        f_g = jax.nn.sigmoid(gates[:, 1 * H:2 * H])
        g_g = jnp.tanh(gates[:, 2 * H:3 * H])
        o_g = jax.nn.sigmoid(gates[:, 3 * H:4 * H])
        c = f_g * c + i_g * g_g
        h = o_g * jnp.tanh(c)
        return (h, c), None

    (h, c), _ = lax.scan(step, (h, c), jnp.transpose(x, (1, 0, 2)))
    out = jnp.maximum(h, 0.0) @ params["w_lin"] + params["b_lin"]
    return out.reshape(-1)


if __name__ == "__main__":
    B, T, F, H = 2, 8, 4, 32  # batch, seq len, num_features, hidden_units

    key = jax.random.PRNGKey(0)
    k_x, k_p = jax.random.split(key)
    x = jax.random.normal(k_x, (B, T, F), jnp.float32)
    params = init_params(k_p, F, H)

    mxu_dtype = _default_mxu_dtype()
    out = shallow_regression_lstm(x, params, mxu_dtype=mxu_dtype)
    out = jax.block_until_ready(out)

    ref = _reference(x, params)
    assert out.shape == (B,), out.shape
    if mxu_dtype == jnp.float32:
        atol = rtol = 1e-5
    else:  # bf16 MXU operands (v6e / v7x): loosen vs. the f32 reference
        atol = rtol = 5e-2
    assert jnp.allclose(out, ref, atol=atol, rtol=rtol), (out, ref)

    print("KERNEL_OK")
</pallas_src>

<mosaic_0001>
module attributes {stable_mosaic.version = 11 : i64} {
  func.func @_lstm_head_kernel(%arg0: i32, %arg1: memref<8x8x4xf32, #tpu.memory_space<vmem>>, %arg2: memref<4x128xf32, #tpu.memory_space<vmem>>, %arg3: memref<32x128xf32, #tpu.memory_space<vmem>>, %arg4: memref<1x128xf32, #tpu.memory_space<vmem>>, %arg5: memref<1x32xf32, #tpu.memory_space<vmem>>, %arg6: memref<1x1xf32, #tpu.memory_space<smem>>, %arg7: memref<8x1xf32, #tpu.memory_space<vmem>>, %arg8: memref<8x8x128xf32, #tpu.memory_space<vmem>>) attributes {dimension_semantics = [#tpu.dimension_semantics<parallel>], iteration_bounds = array<i64: 1>, scalar_prefetch = 0 : i64, scratch_operands = 1 : i64, tpu.core_type = #tpu.core_type<tc>, window_params = [{transform_indices = @transform_0, window_bounds = array<i64: 8, 8, 4>}, {pipeline_mode = #tpu.pipeline_mode<synchronous>, transform_indices = @transform_1, window_bounds = array<i64: 4, 128>}, {pipeline_mode = #tpu.pipeline_mode<synchronous>, transform_indices = @transform_2, window_bounds = array<i64: 32, 128>}, {pipeline_mode = #tpu.pipeline_mode<synchronous>, transform_indices = @transform_3, window_bounds = array<i64: 1, 128>}, {pipeline_mode = #tpu.pipeline_mode<synchronous>, transform_indices = @transform_4, window_bounds = array<i64: 1, 32>}, {transform_indices = @transform_5, window_bounds = array<i64: 1, 1>}, {transform_indices = @transform_6, window_bounds = array<i64: 8, 1>}]} {
    %0 = tpu.iota {dimensions = array<i32: 1>} : vector<1x128xi32>
    %c64_i32 = arith.constant 64 : i32
    %1 = vector.broadcast %c64_i32 : i32 to vector<1x128xi32>
    %2 = arith.cmpi sge, %0, %1 : vector<1x128xi32>
    %c96_i32 = arith.constant 96 : i32
    %3 = vector.broadcast %c96_i32 : i32 to vector<1x128xi32>
    %4 = arith.cmpi slt, %0, %3 : vector<1x128xi32>
    %5 = arith.andi %2, %4 : vector<1x128xi1>
    %cst = arith.constant 1.000000e+00 : f32
    %cst_0 = arith.constant 5.000000e-01 : f32
    %6 = vector.broadcast %cst : f32 to vector<1x128xf32>
    %7 = vector.broadcast %cst_0 : f32 to vector<1x128xf32>
    %8 = arith.select %5, %6, %7 : vector<1x128xi1>, vector<1x128xf32>
    %cst_1 = arith.constant 0.000000e+00 : f32
    %cst_2 = arith.constant 5.000000e-01 : f32
    %9 = vector.broadcast %cst_1 : f32 to vector<1x128xf32>
    %10 = vector.broadcast %cst_2 : f32 to vector<1x128xf32>
    %11 = arith.select %5, %9, %10 : vector<1x128xi1>, vector<1x128xf32>
    %12 = vector.shape_cast %8 : vector<1x128xf32> to vector<1x128xf32>
    %13 = vector.broadcast %12 : vector<1x128xf32> to vector<8x128xf32>
    %14 = vector.shape_cast %11 : vector<1x128xf32> to vector<1x128xf32>
    %15 = vector.broadcast %14 : vector<1x128xf32> to vector<8x128xf32>
    %c0 = arith.constant 0 : index
    %c0_3 = arith.constant 0 : index
    %16 = vector.load %arg2[%c0, %c0_3] : memref<4x128xf32, #tpu.memory_space<vmem>>, vector<4x128xf32>
    %17 = vector.broadcast %8 : vector<1x128xf32> to vector<4x128xf32>
    %18 = arith.mulf %16, %17 : vector<4x128xf32>
    %c0_4 = arith.constant 0 : index
    %c0_5 = arith.constant 0 : index
    %19 = vector.load %arg3[%c0_4, %c0_5] : memref<32x128xf32, #tpu.memory_space<vmem>>, vector<32x128xf32>
    %20 = vector.broadcast %8 : vector<1x128xf32> to vector<32x128xf32>
    %21 = arith.mulf %19, %20 : vector<32x128xf32>
    %c0_6 = arith.constant 0 : index
    %c0_7 = arith.constant 0 : index
    %22 = vector.load %arg4[%c0_6, %c0_7] : memref<1x128xf32, #tpu.memory_space<vmem>>, vector<1x128xf32>
    %23 = arith.mulf %22, %8 : vector<1x128xf32>
    %c0_8 = arith.constant 0 : index
    %c0_9 = arith.constant 0 : index
    %c0_10 = arith.constant 0 : index
    %24 = vector.load %arg1[%c0_8, %c0_9, %c0_10] : memref<8x8x4xf32, #tpu.memory_space<vmem>>, vector<8x8x4xf32>
    %25 = vector.shape_cast %24 : vector<8x8x4xf32> to vector<64x4xf32>
    %cst_11 = arith.constant dense<0.000000e+00> : vector<64x128xf32>
    %26 = tpu.matmul %25, %18, %cst_11 {dimension_numbers = #tpu.dot_dimension_numbers<[1], [0], [0], [1], [0, 0, 1, 1], [], []>} : vector<64x4xf32>, vector<4x128xf32>, vector<64x128xf32> -> vector<64x128xf32>
    %27 = vector.broadcast %23 : vector<1x128xf32> to vector<64x128xf32>
    %28 = arith.addf %26, %27 : vector<64x128xf32>
    %29 = vector.shape_cast %28 : vector<64x128xf32> to vector<8x8x128xf32>
    %c0_12 = arith.constant 0 : index
    %c0_13 = arith.constant 0 : index
    %c0_14 = arith.constant 0 : index
    %30 = vector.load %arg8[%c0_12, %c0_13, %c0_14] : memref<8x8x128xf32, #tpu.memory_space<vmem>>, vector<8x8x128xf32>
    tpu.vector_store %arg8[%c0_12, %c0_13, %c0_14], %29 {strides = array<i32>} : memref<8x8x128xf32, #tpu.memory_space<vmem>>, vector<8x8x128xf32>,
    %cst_15 = arith.constant 0.000000e+00 : f32
    %31 = vector.broadcast %cst_15 : f32 to vector<8x32xf32>
    %cst_16 = arith.constant 0.000000e+00 : f32
    %32 = vector.broadcast %cst_16 : f32 to vector<8x32xf32>
    %c0_17 = arith.constant 0 : index
    %c0_18 = arith.constant 0 : index
    %c0_19 = arith.constant 0 : index
    %33 = vector.load %arg8[%c0_17, %c0_18, %c0_19] : memref<8x8x128xf32, #tpu.memory_space<vmem>>, vector<1x8x128xf32>
    %34 = vector.shape_cast %33 : vector<1x8x128xf32> to vector<8x128xf32>
    %cst_20 = arith.constant dense<0.000000e+00> : vector<8x128xf32>
    %35 = tpu.matmul %31, %21, %cst_20 {dimension_numbers = #tpu.dot_dimension_numbers<[1], [0], [0], [1], [0, 0, 1, 1], [], []>} : vector<8x32xf32>, vector<32x128xf32>, vector<8x128xf32> -> vector<8x128xf32>
    %36 = arith.addf %34, %35 : vector<8x128xf32>
    %37 = math.tanh %36 : vector<8x128xf32>
    %38 = arith.mulf %37, %13 : vector<8x128xf32>
    %39 = arith.addf %38, %15 : vector<8x128xf32>
    %40 = vector.extract_strided_slice %39 {offsets = [0, 0], sizes = [8, 32], strides = [1, 1]} : vector<8x128xf32> to vector<8x32xf32>
    %41 = vector.extract_strided_slice %39 {offsets = [0, 32], sizes = [8, 32], strides = [1, 1]} : vector<8x128xf32> to vector<8x32xf32>
    %42 = vector.extract_strided_slice %39 {offsets = [0, 64], sizes = [8, 32], strides = [1, 1]} : vector<8x128xf32> to vector<8x32xf32>
    %43 = vector.extract_strided_slice %39 {offsets = [0, 96], sizes = [8, 32], strides = [1, 1]} : vector<8x128xf32> to vector<8x32xf32>
    %44 = arith.mulf %41, %32 : vector<8x32xf32>
    %45 = arith.mulf %40, %42 : vector<8x32xf32>
    %46 = arith.addf %44, %45 : vector<8x32xf32>
    %47 = math.tanh %46 : vector<8x32xf32>
    %48 = arith.mulf %43, %47 : vector<8x32xf32>
    %c1 = arith.constant 1 : index
    %c0_21 = arith.constant 0 : index
    %c0_22 = arith.constant 0 : index
    %49 = vector.load %arg8[%c1, %c0_21, %c0_22] : memref<8x8x128xf32, #tpu.memory_space<vmem>>, vector<1x8x128xf32>
    %50 = vector.shape_cast %49 : vector<1x8x128xf32> to vector<8x128xf32>
    %cst_23 = arith.constant dense<0.000000e+00> : vector<8x128xf32>
    %51 = tpu.matmul %48, %21, %cst_23 {dimension_numbers = #tpu.dot_dimension_numbers<[1], [0], [0], [1], [0, 0, 1, 1], [], []>} : vector<8x32xf32>, vector<32x128xf32>, vector<8x128xf32> -> vector<8x128xf32>
    %52 = arith.addf %50, %51 : vector<8x128xf32>
    %53 = math.tanh %52 : vector<8x128xf32>
    %54 = arith.mulf %53, %13 : vector<8x128xf32>
    %55 = arith.addf %54, %15 : vector<8x128xf32>
    %56 = vector.extract_strided_slice %55 {offsets = [0, 0], sizes = [8, 32], strides = [1, 1]} : vector<8x128xf32> to vector<8x32xf32>
    %57 = vector.extract_strided_slice %55 {offsets = [0, 32], sizes = [8, 32], strides = [1, 1]} : vector<8x128xf32> to vector<8x32xf32>
    %58 = vector.extract_strided_slice %55 {offsets = [0, 64], sizes = [8, 32], strides = [1, 1]} : vector<8x128xf32> to vector<8x32xf32>
    %59 = vector.extract_strided_slice %55 {offsets = [0, 96], sizes = [8, 32], strides = [1, 1]} : vector<8x128xf32> to vector<8x32xf32>
    %60 = arith.mulf %57, %46 : vector<8x32xf32>
    %61 = arith.mulf %56, %58 : vector<8x32xf32>
    %62 = arith.addf %60, %61 : vector<8x32xf32>
    %63 = math.tanh %62 : vector<8x32xf32>
    %64 = arith.mulf %59, %63 : vector<8x32xf32>
    %c2 = arith.constant 2 : index
    %c0_24 = arith.constant 0 : index
    %c0_25 = arith.constant 0 : index
    %65 = vector.load %arg8[%c2, %c0_24, %c0_25] : memref<8x8x128xf32, #tpu.memory_space<vmem>>, vector<1x8x128xf32>
    %66 = vector.shape_cast %65 : vector<1x8x128xf32> to vector<8x128xf32>
    %cst_26 = arith.constant dense<0.000000e+00> : vector<8x128xf32>
    %67 = tpu.matmul %64, %21, %cst_26 {dimension_numbers = #tpu.dot_dimension_numbers<[1], [0], [0], [1], [0, 0, 1, 1], [], []>} : vector<8x32xf32>, vector<32x128xf32>, vector<8x128xf32> -> vector<8x128xf32>
    %68 = arith.addf %66, %67 : vector<8x128xf32>
    %69 = math.tanh %68 : vector<8x128xf32>
    %70 = arith.mulf %69, %13 : vector<8x128xf32>
    %71 = arith.addf %70, %15 : vector<8x128xf32>
    %72 = vector.extract_strided_slice %71 {offsets = [0, 0], sizes = [8, 32], strides = [1, 1]} : vector<8x128xf32> to vector<8x32xf32>
    %73 = vector.extract_strided_slice %71 {offsets = [0, 32], sizes = [8, 32], strides = [1, 1]} : vector<8x128xf32> to vector<8x32xf32>
    %74 = vector.extract_strided_slice %71 {offsets = [0, 64], sizes = [8, 32], strides = [1, 1]} : vector<8x128xf32> to vector<8x32xf32>
    %75 = vector.extract_strided_slice %71 {offsets = [0, 96], sizes = [8, 32], strides = [1, 1]} : vector<8x128xf32> to vector<8x32xf32>
    %76 = arith.mulf %73, %62 : vector<8x32xf32>
    %77 = arith.mulf %72, %74 : vector<8x32xf32>
    %78 = arith.addf %76, %77 : vector<8x32xf32>
    %79 = math.tanh %78 : vector<8x32xf32>
    %80 = arith.mulf %75, %79 : vector<8x32xf32>
    %c3 = arith.constant 3 : index
    %c0_27 = arith.constant 0 : index
    %c0_28 = arith.constant 0 : index
    %81 = vector.load %arg8[%c3, %c0_27, %c0_28] : memref<8x8x128xf32, #tpu.memory_space<vmem>>, vector<1x8x128xf32>
    %82 = vector.shape_cast %81 : vector<1x8x128xf32> to vector<8x128xf32>
    %cst_29 = arith.constant dense<0.000000e+00> : vector<8x128xf32>
    %83 = tpu.matmul %80, %21, %cst_29 {dimension_numbers = #tpu.dot_dimension_numbers<[1], [0], [0], [1], [0, 0, 1, 1], [], []>} : vector<8x32xf32>, vector<32x128xf32>, vector<8x128xf32> -> vector<8x128xf32>
    %84 = arith.addf %82, %83 : vector<8x128xf32>
    %85 = math.tanh %84 : vector<8x128xf32>
    %86 = arith.mulf %85, %13 : vector<8x128xf32>
    %87 = arith.addf %86, %15 : vector<8x128xf32>
    %88 = vector.extract_strided_slice %87 {offsets = [0, 0], sizes = [8, 32], strides = [1, 1]} : vector<8x128xf32> to vector<8x32xf32>
    %89 = vector.extract_strided_slice %87 {offsets = [0, 32], sizes = [8, 32], strides = [1, 1]} : vector<8x128xf32> to vector<8x32xf32>
    %90 = vector.extract_strided_slice %87 {offsets = [0, 64], sizes = [8, 32], strides = [1, 1]} : vector<8x128xf32> to vector<8x32xf32>
    %91 = vector.extract_strided_slice %87 {offsets = [0, 96], sizes = [8, 32], strides = [1, 1]} : vector<8x128xf32> to vector<8x32xf32>
    %92 = arith.mulf %89, %78 : vector<8x32xf32>
    %93 = arith.mulf %88, %90 : vector<8x32xf32>
    %94 = arith.addf %92, %93 : vector<8x32xf32>
    %95 = math.tanh %94 : vector<8x32xf32>
    %96 = arith.mulf %91, %95 : vector<8x32xf32>
    %c4 = arith.constant 4 : index
    %c0_30 = arith.constant 0 : index
    %c0_31 = arith.constant 0 : index
    %97 = vector.load %arg8[%c4, %c0_30, %c0_31] : memref<8x8x128xf32, #tpu.memory_space<vmem>>, vector<1x8x128xf32>
    %98 = vector.shape_cast %97 : vector<1x8x128xf32> to vector<8x128xf32>
    %cst_32 = arith.constant dense<0.000000e+00> : vector<8x128xf32>
    %99 = tpu.matmul %96, %21, %cst_32 {dimension_numbers = #tpu.dot_dimension_numbers<[1], [0], [0], [1], [0, 0, 1, 1], [], []>} : vector<8x32xf32>, vector<32x128xf32>, vector<8x128xf32> -> vector<8x128xf32>
    %100 = arith.addf %98, %99 : vector<8x128xf32>
    %101 = math.tanh %100 : vector<8x128xf32>
    %102 = arith.mulf %101, %13 : vector<8x128xf32>
    %103 = arith.addf %102, %15 : vector<8x128xf32>
    %104 = vector.extract_strided_slice %103 {offsets = [0, 0], sizes = [8, 32], strides = [1, 1]} : vector<8x128xf32> to vector<8x32xf32>
    %105 = vector.extract_strided_slice %103 {offsets = [0, 32], sizes = [8, 32], strides = [1, 1]} : vector<8x128xf32> to vector<8x32xf32>
    %106 = vector.extract_strided_slice %103 {offsets = [0, 64], sizes = [8, 32], strides = [1, 1]} : vector<8x128xf32> to vector<8x32xf32>
    %107 = vector.extract_strided_slice %103 {offsets = [0, 96], sizes = [8, 32], strides = [1, 1]} : vector<8x128xf32> to vector<8x32xf32>
    %108 = arith.mulf %105, %94 : vector<8x32xf32>
    %109 = arith.mulf %104, %106 : vector<8x32xf32>
    %110 = arith.addf %108, %109 : vector<8x32xf32>
    %111 = math.tanh %110 : vector<8x32xf32>
    %112 = arith.mulf %107, %111 : vector<8x32xf32>
    %c5 = arith.constant 5 : index
    %c0_33 = arith.constant 0 : index
    %c0_34 = arith.constant 0 : index
    %113 = vector.load %arg8[%c5, %c0_33, %c0_34] : memref<8x8x128xf32, #tpu.memory_space<vmem>>, vector<1x8x128xf32>
    %114 = vector.shape_cast %113 : vector<1x8x128xf32> to vector<8x128xf32>
    %cst_35 = arith.constant dense<0.000000e+00> : vector<8x128xf32>
    %115 = tpu.matmul %112, %21, %cst_35 {dimension_numbers = #tpu.dot_dimension_numbers<[1], [0], [0], [1], [0, 0, 1, 1], [], []>} : vector<8x32xf32>, vector<32x128xf32>, vector<8x128xf32> -> vector<8x128xf32>
    %116 = arith.addf %114, %115 : vector<8x128xf32>
    %117 = math.tanh %116 : vector<8x128xf32>
    %118 = arith.mulf %117, %13 : vector<8x128xf32>
    %119 = arith.addf %118, %15 : vector<8x128xf32>
    %120 = vector.extract_strided_slice %119 {offsets = [0, 0], sizes = [8, 32], strides = [1, 1]} : vector<8x128xf32> to vector<8x32xf32>
    %121 = vector.extract_strided_slice %119 {offsets = [0, 32], sizes = [8, 32], strides = [1, 1]} : vector<8x128xf32> to vector<8x32xf32>
    %122 = vector.extract_strided_slice %119 {offsets = [0, 64], sizes = [8, 32], strides = [1, 1]} : vector<8x128xf32> to vector<8x32xf32>
    %123 = vector.extract_strided_slice %119 {offsets = [0, 96], sizes = [8, 32], strides = [1, 1]} : vector<8x128xf32> to vector<8x32xf32>
    %124 = arith.mulf %121, %110 : vector<8x32xf32>
    %125 = arith.mulf %120, %122 : vector<8x32xf32>
    %126 = arith.addf %124, %125 : vector<8x32xf32>
    %127 = math.tanh %126 : vector<8x32xf32>
    %128 = arith.mulf %123, %127 : vector<8x32xf32>
    %c6 = arith.constant 6 : index
    %c0_36 = arith.constant 0 : index
    %c0_37 = arith.constant 0 : index
    %129 = vector.load %arg8[%c6, %c0_36, %c0_37] : memref<8x8x128xf32, #tpu.memory_space<vmem>>, vector<1x8x128xf32>
    %130 = vector.shape_cast %129 : vector<1x8x128xf32> to vector<8x128xf32>
    %cst_38 = arith.constant dense<0.000000e+00> : vector<8x128xf32>
    %131 = tpu.matmul %128, %21, %cst_38 {dimension_numbers = #tpu.dot_dimension_numbers<[1], [0], [0], [1], [0, 0, 1, 1], [], []>} : vector<8x32xf32>, vector<32x128xf32>, vector<8x128xf32> -> vector<8x128xf32>
    %132 = arith.addf %130, %131 : vector<8x128xf32>
    %133 = math.tanh %132 : vector<8x128xf32>
    %134 = arith.mulf %133, %13 : vector<8x128xf32>
    %135 = arith.addf %134, %15 : vector<8x128xf32>
    %136 = vector.extract_strided_slice %135 {offsets = [0, 0], sizes = [8, 32], strides = [1, 1]} : vector<8x128xf32> to vector<8x32xf32>
    %137 = vector.extract_strided_slice %135 {offsets = [0, 32], sizes = [8, 32], strides = [1, 1]} : vector<8x128xf32> to vector<8x32xf32>
    %138 = vector.extract_strided_slice %135 {offsets = [0, 64], sizes = [8, 32], strides = [1, 1]} : vector<8x128xf32> to vector<8x32xf32>
    %139 = vector.extract_strided_slice %135 {offsets = [0, 96], sizes = [8, 32], strides = [1, 1]} : vector<8x128xf32> to vector<8x32xf32>
    %140 = arith.mulf %137, %126 : vector<8x32xf32>
    %141 = arith.mulf %136, %138 : vector<8x32xf32>
    %142 = arith.addf %140, %141 : vector<8x32xf32>
    %143 = math.tanh %142 : vector<8x32xf32>
    %144 = arith.mulf %139, %143 : vector<8x32xf32>
    %c7 = arith.constant 7 : index
    %c0_39 = arith.constant 0 : index
    %c0_40 = arith.constant 0 : index
    %145 = vector.load %arg8[%c7, %c0_39, %c0_40] : memref<8x8x128xf32, #tpu.memory_space<vmem>>, vector<1x8x128xf32>
    %146 = vector.shape_cast %145 : vector<1x8x128xf32> to vector<8x128xf32>
    %cst_41 = arith.constant dense<0.000000e+00> : vector<8x128xf32>
    %147 = tpu.matmul %144, %21, %cst_41 {dimension_numbers = #tpu.dot_dimension_numbers<[1], [0], [0], [1], [0, 0, 1, 1], [], []>} : vector<8x32xf32>, vector<32x128xf32>, vector<8x128xf32> -> vector<8x128xf32>
    %148 = arith.addf %146, %147 : vector<8x128xf32>
    %149 = math.tanh %148 : vector<8x128xf32>
    %150 = arith.mulf %149, %13 : vector<8x128xf32>
    %151 = arith.addf %150, %15 : vector<8x128xf32>
    %152 = vector.extract_strided_slice %151 {offsets = [0, 0], sizes = [8, 32], strides = [1, 1]} : vector<8x128xf32> to vector<8x32xf32>
    %153 = vector.extract_strided_slice %151 {offsets = [0, 32], sizes = [8, 32], strides = [1, 1]} : vector<8x128xf32> to vector<8x32xf32>
    %154 = vector.extract_strided_slice %151 {offsets = [0, 64], sizes = [8, 32], strides = [1, 1]} : vector<8x128xf32> to vector<8x32xf32>
    %155 = vector.extract_strided_slice %151 {offsets = [0, 96], sizes = [8, 32], strides = [1, 1]} : vector<8x128xf32> to vector<8x32xf32>
    %156 = arith.mulf %153, %142 : vector<8x32xf32>
    %157 = arith.mulf %152, %154 : vector<8x32xf32>
    %158 = arith.addf %156, %157 : vector<8x32xf32>
    %159 = math.tanh %158 : vector<8x32xf32>
    %160 = arith.mulf %155, %159 : vector<8x32xf32>
    %cst_42 = arith.constant 0.000000e+00 : f32
    %161 = vector.broadcast %cst_42 : f32 to vector<8x32xf32>
    %162 = arith.maximumf %160, %161 : vector<8x32xf32>
    %c0_43 = arith.constant 0 : index
    %c0_44 = arith.constant 0 : index
    %163 = vector.load %arg5[%c0_43, %c0_44] : memref<1x32xf32, #tpu.memory_space<vmem>>, vector<1x32xf32>
    %164 = vector.broadcast %163 : vector<1x32xf32> to vector<8x32xf32>
    %165 = arith.mulf %162, %164 : vector<8x32xf32>
    %cst_45 = arith.constant dense<0.000000e+00> : vector<8xf32>
    %166 = vector.multi_reduction <add>, %165, %cst_45 [1] : vector<8x32xf32> to vector<8xf32>
    %167 = vector.shape_cast %166 : vector<8xf32> to vector<8x1xf32>
    %c0_46 = arith.constant 0 : index
    %c0_47 = arith.constant 0 : index
    %168 = memref.load %arg6[%c0_46, %c0_47] : memref<1x1xf32, #tpu.memory_space<smem>>
    %169 = vector.broadcast %168 : f32 to vector<8x1xf32>
    %170 = arith.addf %167, %169 : vector<8x1xf32>
    %c0_48 = arith.constant 0 : index
    %c0_49 = arith.constant 0 : index
    %171 = vector.load %arg7[%c0_48, %c0_49] : memref<8x1xf32, #tpu.memory_space<vmem>>, vector<8x1xf32>
    tpu.vector_store %arg7[%c0_48, %c0_49], %170 {strides = array<i32>} : memref<8x1xf32, #tpu.memory_space<vmem>>, vector<8x1xf32>,
    return
  }
  func.func @transform_0(%arg0: i32) -> (i32, i32, i32) {
    %c0_i32 = arith.constant 0 : i32
    %c0_i32_0 = arith.constant 0 : i32
    %c0_i32_1 = arith.constant 0 : i32
    return %c0_i32, %arg0, %c0_i32_0 : i32, i32, i32
  }
  func.func @transform_1(%arg0: i32) -> (i32, i32) {
    %c0_i32 = arith.constant 0 : i32
    %c0_i32_0 = arith.constant 0 : i32
    %c0_i32_1 = arith.constant 0 : i32
    return %c0_i32, %c0_i32_0 : i32, i32
  }
  func.func @transform_2(%arg0: i32) -> (i32, i32) {
    %c0_i32 = arith.constant 0 : i32
    %c0_i32_0 = arith.constant 0 : i32
    %c0_i32_1 = arith.constant 0 : i32
    return %c0_i32, %c0_i32_0 : i32, i32
  }
  func.func @transform_3(%arg0: i32) -> (i32, i32) {
    %c0_i32 = arith.constant 0 : i32
    %c0_i32_0 = arith.constant 0 : i32
    %c0_i32_1 = arith.constant 0 : i32
    return %c0_i32, %c0_i32_0 : i32, i32
  }
  func.func @transform_4(%arg0: i32) -> (i32, i32) {
    %c0_i32 = arith.constant 0 : i32
    %c0_i32_0 = arith.constant 0 : i32
    %c0_i32_1 = arith.constant 0 : i32
    return %c0_i32, %c0_i32_0 : i32, i32
  }
  func.func @transform_5(%arg0: i32) -> (i32, i32) {
    %c0_i32 = arith.constant 0 : i32
    %c0_i32_0 = arith.constant 0 : i32
    %c0_i32_1 = arith.constant 0 : i32
    return %c0_i32, %c0_i32_0 : i32, i32
  }
  func.func @transform_6(%arg0: i32) -> (i32, i32) {
    %c0_i32 = arith.constant 0 : i32
    %c0_i32_0 = arith.constant 0 : i32
    return %arg0, %c0_i32 : i32, i32
  }
}

</mosaic_0001>

<llo_original>
// kernel: tpu_custom_call.1
$region0: #{tpu_custom_call.1}
  #allocation0 [shape = 'u32[]', space=smem, size = 0x4, offset = 0x4, fixed_abs, tag = 'smem constant byte address 0x4 - core index']
  #allocation1 [shape = 'u32[144,128]{1,0:T(1,128)}', space=vmem, size = 0x12000, scoped, tag = 'internal scratch']
  #allocation2 [shape = 'f32[8,8,128]{2,1,0:T(8,128)}', space=vmem, size = 0x8000, scoped, tag = 'scratch operand']
  #allocation3 [shape = 'f32[1,1]{1,0:T(1,128)S(6)}', space=smem, size = 0x200, scoped, tag = 'scoped memory for tpu_custom_call.1']
  %s0 = inlined_call_operand.vmem [shape: f32[8,8,4], index: 0, kind: input, shape index: {}]
  %s1 = inlined_call_operand.vmem [shape: f32[4,128], index: 1, kind: input, shape index: {}]
  %s2 = inlined_call_operand.vmem [shape: f32[32,128], index: 2, kind: input, shape index: {}]
  %s3 = inlined_call_operand.vmem [shape: f32[1,128], index: 3, kind: input, shape index: {}]
  %s4 = inlined_call_operand.vmem [shape: f32[1,32], index: 4, kind: input, shape index: {}]
  %s5 = inlined_call_operand.<no memory space> [shape: f32[1,1], index: 5, kind: input, shape index: {}]
  %s6 = inlined_call_operand.vmem [shape: f32[8,1], index: 6, kind: output, shape index: {}]
  %s7 = sld [smem:[#allocation0]]
  $region34: #{tpu_custom_call.1} parent=0
    _
  %s9 = ssub.s32 1, %s7
  %s10 = scalar_select 0, %s9, %s7
  %11 = sst [smem:[#allocation3]] %s5
  // Predicated region
  $region2: #{tpu_custom_call.1} parent=0 // pred_check
    _
  $region3: #{tpu_custom_call.1} parent=0 // pred_check_branch
    %13 = sbr.rel (0) target = $region5
  $region4: #{tpu_custom_call.1} parent=0 // pred_region
    _
  $region5: #{tpu_custom_call.1} parent=0 // pred_fallthru
    _
  // Predicated region
  $region6: #{tpu_custom_call.1} parent=0 // pred_check
    _
  $region7: #{tpu_custom_call.1} parent=0 // pred_check_branch
    %15 = sbr.rel (0) target = $region9
  $region8: #{tpu_custom_call.1} parent=0 // pred_region
    _
  $region9: #{tpu_custom_call.1} parent=0 // pred_fallthru
    _
  // Predicated region
  $region10: #{tpu_custom_call.1} parent=0 // pred_check
    _
  $region11: #{tpu_custom_call.1} parent=0 // pred_check_branch
    %17 = sbr.rel (0) target = $region13
  $region12: #{tpu_custom_call.1} parent=0 // pred_region
    _
  $region13: #{tpu_custom_call.1} parent=0 // pred_fallthru
    _
  // Predicated region
  $region14: #{tpu_custom_call.1} parent=0 // pred_check
    _
  $region15: #{tpu_custom_call.1} parent=0 // pred_check_branch
    %19 = sbr.rel (0) target = $region17
  $region16: #{tpu_custom_call.1} parent=0 // pred_region
    _
  $region17: #{tpu_custom_call.1} parent=0 // pred_fallthru
    _
  // Predicated region
  $region18: #{tpu_custom_call.1} parent=0 // pred_check
    _
  $region19: #{tpu_custom_call.1} parent=0 // pred_check_branch
    %21 = sbr.rel (0) target = $region21
  $region20: #{tpu_custom_call.1} parent=0 // pred_region
    _
  $region21: #{tpu_custom_call.1} parent=0 // pred_fallthru
    _
  // Predicated region
  $region22: #{tpu_custom_call.1} parent=0 // pred_check
    _
  $region23: #{tpu_custom_call.1} parent=0 // pred_check_branch
    %23 = sbr.rel (0) target = $region25
  $region24: #{tpu_custom_call.1} parent=0 // pred_region
    _
  $region25: #{tpu_custom_call.1} parent=0 // pred_fallthru
    _
  %v24 = vlaneseq
  %v25 = vand.u32 %v24, 127
  %vm26 = vcmp.ge.s32.totalorder %v25, 64
  %vm27 = vcmp.lt.s32.totalorder %v25, 96
  %vm28 = vmand %vm26, %vm27
  %v29 = vsel %vm28, 1.0, 0.5
  %v30 = vsel %vm28, 0.0, 0.5
  %v31 = vld [vmem:[%s1] sm:$0xf]
  %v32 = vmul.f32 %v31, %v29
  %v33 = vld [vmem:[%s2] sm:$0xff]
  %v34 = vld [vmem:[%s2 + $0x8] sm:$0xff]
  %v35 = vld [vmem:[%s2 + $0x10] sm:$0xff]
  %v36 = vld [vmem:[%s2 + $0x18] sm:$0xff]
  %v37 = vmul.f32 %v33, %v29
  %v38 = vmul.f32 %v34, %v29
  %v39 = vmul.f32 %v35, %v29
  %v40 = vmul.f32 %v36, %v29
  %v41 = vld [vmem:[%s3] sm:$0x1]
  %v42 = vmul.f32 %v41, %v29
  %v43 = vld [vmem:[%s0] sm:$0xff]
  %v44 = vld [vmem:[%s0 + $0x8] sm:$0xff]
  %v45 = vld [vmem:[%s0 + $0x10] sm:$0xff]
  %v46 = vld [vmem:[%s0 + $0x18] sm:$0xff]
  %v47 = vld [vmem:[%s0 + $0x20] sm:$0xff]
  %v48 = vld [vmem:[%s0 + $0x28] sm:$0xff]
  %v49 = vld [vmem:[%s0 + $0x30] sm:$0xff]
  %v50 = vld [vmem:[%s0 + $0x38] sm:$0xff]
  %v52 = vlaneseq
  %v53 = vshrl.u32 %v52, 7
  %v54 = vsub.s32 0, %v53
  %v55 = vrot.slane %v42, %v54
  %vm57 = vcmask 31744
  %v59 = vsel %vm57, %v43, 0
  %v62 = vsel %vm57, %v44, 0
  %v65 = vsel %vm57, %v45, 0
  %v68 = vsel %vm57, %v46, 0
  %v71 = vsel %vm57, %v47, 0
  %v74 = vsel %vm57, %v48, 0
  %v77 = vsel %vm57, %v49, 0
  %v80 = vsel %vm57, %v50, 0
  %vm82 = vcmask 1043456
  %v84 = vsel %vm82, %v32, 0
  %86 = vmatprep.subr.mxu0 0.0
  %87 = vmatpush1.msra.mxu0 %v84
  %88 = vmatprep.subr.mxu0 0.0
  %89 = vmatpush1.msra.mxu0 0.0
  %90 = vmatprep.subr.mxu0 0.0
  %91 = vmatpush1.msra.mxu0 0.0
  %92 = vmatprep.subr.mxu0 0.0
  %93 = vmatpush1.msra.mxu0 0.0
  %94 = vmatprep.subr.mxu0 0.0
  %95 = vmatpush1.msra.mxu0 0.0
  %96 = vmatprep.subr.mxu0 0.0
  %97 = vmatpush1.msra.mxu0 0.0
  %98 = vmatprep.subr.mxu0 0.0
  %99 = vmatpush1.msra.mxu0 0.0
  %100 = vmatprep.subr.mxu0 0.0
  %101 = vmatpush1.msra.mxu0 0.0
  %102 = vmatprep.subr.mxu0 0.0
  %103 = vmatpush1.msra.mxu0 0.0
  %104 = vmatprep.subr.mxu0 0.0
  %105 = vmatpush1.msra.mxu0 0.0
  %106 = vmatprep.subr.mxu0 0.0
  %107 = vmatpush1.msra.mxu0 0.0
  %108 = vmatprep.subr.mxu0 0.0
  %109 = vmatpush1.msra.mxu0 0.0
  %110 = vmatprep.subr.mxu0 0.0
  %111 = vmatpush1.msra.mxu0 0.0
  %112 = vmatprep.subr.mxu0 0.0
  %113 = vmatpush1.msra.mxu0 0.0
  %114 = vmatprep.subr.mxu0 0.0
  %115 = vmatpush1.msra.mxu0 0.0
  %116 = vmatprep.subr.mxu0 0.0
  %117 = vmatpush1.msra.mxu0 0.0
  %118 = vmatprep.subr.mxu0 0.0
  %119 = vmatpush1.msra.mxu0 0.0
  %120 = vmatprep.subr.mxu0 0.0
  %121 = vmatpush1.msra.mxu0 0.0
  %122 = vmatprep.subr.mxu0 0.0
  %123 = vmatpush1.msra.mxu0 0.0
  %124 = vmatprep.subr.mxu0 0.0
  %125 = vmatpush1.msra.mxu0 0.0
  %126 = vmatprep.subr.mxu0 0.0
  %127 = vmatpush1.msra.mxu0 0.0
  %128 = vmatprep.subr.mxu0 0.0
  %129 = vmatpush1.msra.mxu0 0.0
  %130 = vmatprep.subr.mxu0 0.0
  %131 = vmatpush1.msra.mxu0 0.0
  %132 = vmatprep.subr.mxu0 0.0
  %133 = vmatpush1.msra.mxu0 0.0
  %134 = vmatprep.subr.mxu0 0.0
  %135 = vmatpush1.msra.mxu0 0.0
  %136 = vmatprep.subr.mxu0 0.0
  %137 = vmatpush1.msra.mxu0 0.0
  %138 = vmatprep.subr.mxu0 0.0
  %139 = vmatpush1.msra.mxu0 0.0
  %140 = vmatprep.subr.mxu0 0.0
  %141 = vmatpush1.msra.mxu0 0.0
  %142 = vmatprep.subr.mxu0 0.0
  %143 = vmatpush1.msra.mxu0 0.0
  %144 = vmatprep.subr.mxu0 0.0
  %145 = vmatpush1.msra.mxu0 0.0
  %146 = vmatprep.subr.mxu0 0.0
  %147 = vmatpush1.msra.mxu0 0.0
  %148 = vmatprep.subr.mxu0 0.0
  %149 = vmatpush1.msra.mxu0 0.0
  %150 = vmatprep.mubr.f32.mxu0 0.0
  %151 = vmatmul.mubr.f32.gmra.mrb[0].mxu0 %v59
  %v152 = vpop.f32.mrb[0].mxu0
  %v153 = vadd.f32 %v55, %v152
  %v154 = vpop.f32.mrb[0].mxu0
  %155 = vmatprep.mubr.f32.mxu0 0.0
  %156 = vmatmul.mubr.f32.gmra.mrb[0].mxu0 %v62
  %v157 = vpop.f32.mrb[0].mxu0
  %v158 = vadd.f32 %v55, %v157
  %v159 = vpop.f32.mrb[0].mxu0
  %160 = vmatprep.mubr.f32.mxu0 0.0
  %161 = vmatmul.mubr.f32.gmra.mrb[0].mxu0 %v65
  %v162 = vpop.f32.mrb[0].mxu0
  %v163 = vadd.f32 %v55, %v162
  %v164 = vpop.f32.mrb[0].mxu0
  %165 = vmatprep.mubr.f32.mxu0 0.0
  %166 = vmatmul.mubr.f32.gmra.mrb[0].mxu0 %v68
  %v167 = vpop.f32.mrb[0].mxu0
  %v168 = vadd.f32 %v55, %v167
  %v169 = vpop.f32.mrb[0].mxu0
  %170 = vmatprep.mubr.f32.mxu0 0.0
  %171 = vmatmul.mubr.f32.gmra.mrb[0].mxu0 %v71
  %v172 = vpop.f32.mrb[0].mxu0
  %v173 = vadd.f32 %v55, %v172
  %v174 = vpop.f32.mrb[0].mxu0
  %175 = vmatprep.mubr.f32.mxu0 0.0
  %176 = vmatmul.mubr.f32.gmra.mrb[0].mxu0 %v74
  %v177 = vpop.f32.mrb[0].mxu0
  %v178 = vadd.f32 %v55, %v177
  %v179 = vpop.f32.mrb[0].mxu0
  %180 = vmatprep.mubr.f32.mxu0 0.0
  %181 = vmatmul.mubr.f32.gmra.mrb[0].mxu0 %v77
  %v182 = vpop.f32.mrb[0].mxu0
  %v183 = vadd.f32 %v55, %v182
  %v184 = vpop.f32.mrb[0].mxu0
  %185 = vmatprep.mubr.f32.mxu0 0.0
  %186 = vmatmul.mubr.f32.gmra.mrb[0].mxu0 %v80
  %v187 = vpop.f32.mrb[0].mxu0
  %v188 = vadd.f32 %v55, %v187
  %v189 = vpop.f32.mrb[0].mxu0
  %190 = vdwg.mxu0
  %191 = vst [vmem:[#allocation2] sm:$0xff] %v153
  %192 = vst [vmem:[#allocation2 + $0x8] sm:$0xff] %v158
  %193 = vst [vmem:[#allocation2 + $0x10] sm:$0xff] %v163
  %194 = vst [vmem:[#allocation2 + $0x18] sm:$0xff] %v168
  %195 = vst [vmem:[#allocation2 + $0x20] sm:$0xff] %v173
  %196 = vst [vmem:[#allocation2 + $0x28] sm:$0xff] %v178
  %197 = vst [vmem:[#allocation2 + $0x30] sm:$0xff] %v183
  %198 = vst [vmem:[#allocation2 + $0x38] sm:$0xff] %v188
  %v199 = vld [vmem:[#allocation2] sm:$0xff]
  %vm200 = vcmask 261120
  %v202 = vsel %vm200, 0.0, 0
  %204 = vmatprep.subr.mxu0 0.0
  %205 = vmatpush1.msra.mxu0 %v37
  %206 = vmatprep.subr.mxu0 0.0
  %207 = vmatpush1.msra.mxu0 %v38
  %208 = vmatprep.subr.mxu0 0.0
  %209 = vmatpush1.msra.mxu0 %v39
  %210 = vmatprep.subr.mxu0 0.0
  %211 = vmatpush1.msra.mxu0 %v40
  %212 = vmatprep.subr.mxu0 0.0
  %213 = vmatpush1.msra.mxu0 0.0
  %214 = vmatprep.subr.mxu0 0.0
  %215 = vmatpush1.msra.mxu0 0.0
  %216 = vmatprep.subr.mxu0 0.0
  %217 = vmatpush1.msra.mxu0 0.0
  %218 = vmatprep.subr.mxu0 0.0
  %219 = vmatpush1.msra.mxu0 0.0
  %220 = vmatprep.subr.mxu0 0.0
  %221 = vmatpush1.msra.mxu0 0.0
  %222 = vmatprep.subr.mxu0 0.0
  %223 = vmatpush1.msra.mxu0 0.0
  %224 = vmatprep.subr.mxu0 0.0
  %225 = vmatpush1.msra.mxu0 0.0
  %226 = vmatprep.subr.mxu0 0.0
  %227 = vmatpush1.msra.mxu0 0.0
  %228 = vmatprep.subr.mxu0 0.0
  %229 = vmatpush1.msra.mxu0 0.0
  %230 = vmatprep.subr.mxu0 0.0
  %231 = vmatpush1.msra.mxu0 0.0
  %232 = vmatprep.subr.mxu0 0.0
  %233 = vmatpush1.msra.mxu0 0.0
  %234 = vmatprep.subr.mxu0 0.0
  %235 = vmatpush1.msra.mxu0 0.0
  %236 = vmatprep.subr.mxu0 0.0
  %237 = vmatpush1.msra.mxu0 0.0
  %238 = vmatprep.subr.mxu0 0.0
  %239 = vmatpush1.msra.mxu0 0.0
  %240 = vmatprep.subr.mxu0 0.0
  %241 = vmatpush1.msra.mxu0 0.0
  %242 = vmatprep.subr.mxu0 0.0
  %243 = vmatpush1.msra.mxu0 0.0
  %244 = vmatprep.subr.mxu0 0.0
  %245 = vmatpush1.msra.mxu0 0.0
  %246 = vmatprep.subr.mxu0 0.0
  %247 = vmatpush1.msra.mxu0 0.0
  %248 = vmatprep.subr.mxu0 0.0
  %249 = vmatpush1.msra.mxu0 0.0
  %250 = vmatprep.subr.mxu0 0.0
  %251 = vmatpush1.msra.mxu0 0.0
  %252 = vmatprep.subr.mxu0 0.0
  %253 = vmatpush1.msra.mxu0 0.0
  %254 = vmatprep.subr.mxu0 0.0
  %255 = vmatpush1.msra.mxu0 0.0
  %256 = vmatprep.subr.mxu0 0.0
  %257 = vmatpush1.msra.mxu0 0.0
  %258 = vmatprep.subr.mxu0 0.0
  %259 = vmatpush1.msra.mxu0 0.0
  %260 = vmatprep.subr.mxu0 0.0
  %261 = vmatpush1.msra.mxu0 0.0
  %262 = vmatprep.subr.mxu0 0.0
  %263 = vmatpush1.msra.mxu0 0.0
  %264 = vmatprep.subr.mxu0 0.0
  %265 = vmatpush1.msra.mxu0 0.0
  %266 = vmatprep.subr.mxu0 0.0
  %267 = vmatpush1.msra.mxu0 0.0
  %268 = vmatprep.mubr.f32.mxu0 0.0
  %269 = vmatmul.mubr.f32.gmra.mrb[0].mxu0 %v202
  %v270 = vpop.f32.mrb[0].mxu0
  %v271 = vadd.f32 0.0, %v270
  %v272 = vpop.f32.mrb[0].mxu0
  %273 = vdwg.mxu0
  %v274 = vadd.f32 %v199, %v271
  %v275 = vtanh.pop %v274
  %v276 = vmul.f32 %v275, %v29
  %v277 = vadd.f32 %v276, %v30
  %v278 = vmul.f32 %v277, 0.0
  %280 = vrot.lane.b32.xlu0 %v277, 64
  %v281 = vpop.permute.xlu0 %280
  %v283 = vmul.f32 %v277, %v281
  %285 = vrot.lane.b32.xlu0 %v283, 32
  %v286 = vpop.permute.xlu0 %285
  %v288 = vadd.f32 %v278, %v286
  %v289 = vtanh.pop %v288
  %291 = vrot.lane.b32.xlu0 %v289, 64
  %v292 = vpop.permute.xlu0 %291
  %v294 = vmul.f32 %v277, %v292
  %s295 = scalar_lea.vmem [#allocation2], 8
  %v296 = vld [vmem:[%s295] sm:$0xff]
  %298 = vrot.lane.b32.xlu0 %v294, 32
  %v299 = vpop.permute.xlu0 %298
  %v300 = vsel %vm200, %v299, 0
  %302 = vmatprep.subr.mxu0 0.0
  %303 = vmatpush1.msra.mxu0 %v37
  %304 = vmatprep.subr.mxu0 0.0
  %305 = vmatpush1.msra.mxu0 %v38
  %306 = vmatprep.subr.mxu0 0.0
  %307 = vmatpush1.msra.mxu0 %v39
  %308 = vmatprep.subr.mxu0 0.0
  %309 = vmatpush1.msra.mxu0 %v40
  %310 = vmatprep.subr.mxu0 0.0
  %311 = vmatpush1.msra.mxu0 0.0
  %312 = vmatprep.subr.mxu0 0.0
  %313 = vmatpush1.msra.mxu0 0.0
  %314 = vmatprep.subr.mxu0 0.0
  %315 = vmatpush1.msra.mxu0 0.0
  %316 = vmatprep.subr.mxu0 0.0
  %317 = vmatpush1.msra.mxu0 0.0
  %318 = vmatprep.subr.mxu0 0.0
  %319 = vmatpush1.msra.mxu0 0.0
  %320 = vmatprep.subr.mxu0 0.0
  %321 = vmatpush1.msra.mxu0 0.0
  %322 = vmatprep.subr.mxu0 0.0
  %323 = vmatpush1.msra.mxu0 0.0
  %324 = vmatprep.subr.mxu0 0.0
  %325 = vmatpush1.msra.mxu0 0.0
  %326 = vmatprep.subr.mxu0 0.0
  %327 = vmatpush1.msra.mxu0 0.0
  %328 = vmatprep.subr.mxu0 0.0
  %329 = vmatpush1.msra.mxu0 0.0
  %330 = vmatprep.subr.mxu0 0.0
  %331 = vmatpush1.msra.mxu0 0.0
  %332 = vmatprep.subr.mxu0 0.0
  %333 = vmatpush1.msra.mxu0 0.0
  %334 = vmatprep.subr.mxu0 0.0
  %335 = vmatpush1.msra.mxu0 0.0
  %336 = vmatprep.subr.mxu0 0.0
  %337 = vmatpush1.msra.mxu0 0.0
  %338 = vmatprep.subr.mxu0 0.0
  %339 = vmatpush1.msra.mxu0 0.0
  %340 = vmatprep.subr.mxu0 0.0
  %341 = vmatpush1.msra.mxu0 0.0
  %342 = vmatprep.subr.mxu0 0.0
  %343 = vmatpush1.msra.mxu0 0.0
  %344 = vmatprep.subr.mxu0 0.0
  %345 = vmatpush1.msra.mxu0 0.0
  %346 = vmatprep.subr.mxu0 0.0
  %347 = vmatpush1.msra.mxu0 0.0
  %348 = vmatprep.subr.mxu0 0.0
  %349 = vmatpush1.msra.mxu0 0.0
  %350 = vmatprep.subr.mxu0 0.0
  %351 = vmatpush1.msra.mxu0 0.0
  %352 = vmatprep.subr.mxu0 0.0
  %353 = vmatpush1.msra.mxu0 0.0
  %354 = vmatprep.subr.mxu0 0.0
  %355 = vmatpush1.msra.mxu0 0.0
  %356 = vmatprep.subr.mxu0 0.0
  %357 = vmatpush1.msra.mxu0 0.0
  %358 = vmatprep.subr.mxu0 0.0
  %359 = vmatpush1.msra.mxu0 0.0
  %360 = vmatprep.subr.mxu0 0.0
  %361 = vmatpush1.msra.mxu0 0.0
  %362 = vmatprep.subr.mxu0 0.0
  %363 = vmatpush1.msra.mxu0 0.0
  %364 = vmatprep.subr.mxu0 0.0
  %365 = vmatpush1.msra.mxu0 0.0
  %366 = vmatprep.mubr.f32.mxu0 0.0
  %367 = vmatmul.mubr.f32.gmra.mrb[0].mxu0 %v300
  %v368 = vpop.f32.mrb[0].mxu0
  %v369 = vadd.f32 0.0, %v368
  %v370 = vpop.f32.mrb[0].mxu0
  %371 = vdwg.mxu0
  %v372 = vadd.f32 %v296, %v369
  %v373 = vtanh.pop %v372
  %v374 = vmul.f32 %v373, %v29
  %v375 = vadd.f32 %v374, %v30
  %v376 = vmul.f32 %v375, %v288
  %378 = vrot.lane.b32.xlu0 %v375, 64
  %v379 = vpop.permute.xlu0 %378
  %v381 = vmul.f32 %v375, %v379
  %383 = vrot.lane.b32.xlu0 %v381, 32
  %v384 = vpop.permute.xlu0 %383
  %v386 = vadd.f32 %v376, %v384
  %v387 = vtanh.pop %v386
  %389 = vrot.lane.b32.xlu0 %v387, 64
  %v390 = vpop.permute.xlu0 %389
  %v392 = vmul.f32 %v375, %v390
  %s393 = scalar_lea.vmem [#allocation2], 16
  %v394 = vld [vmem:[%s393] sm:$0xff]
  %396 = vrot.lane.b32.xlu0 %v392, 32
  %v397 = vpop.permute.xlu0 %396
  %v398 = vsel %vm200, %v397, 0
  %400 = vmatprep.subr.mxu0 0.0
  %401 = vmatpush1.msra.mxu0 %v37
  %402 = vmatprep.subr.mxu0 0.0
  %403 = vmatpush1.msra.mxu0 %v38
  %404 = vmatprep.subr.mxu0 0.0
  %405 = vmatpush1.msra.mxu0 %v39
  %406 = vmatprep.subr.mxu0 0.0
  %407 = vmatpush1.msra.mxu0 %v40
  %408 = vmatprep.subr.mxu0 0.0
  %409 = vmatpush1.msra.mxu0 0.0
  %410 = vmatprep.subr.mxu0 0.0
  %411 = vmatpush1.msra.mxu0 0.0
  %412 = vmatprep.subr.mxu0 0.0
  %413 = vmatpush1.msra.mxu0 0.0
  %414 = vmatprep.subr.mxu0 0.0
  %415 = vmatpush1.msra.mxu0 0.0
  %416 = vmatprep.subr.mxu0 0.0
  %417 = vmatpush1.msra.mxu0 0.0
  %418 = vmatprep.subr.mxu0 0.0
  %419 = vmatpush1.msra.mxu0 0.0
  %420 = vmatprep.subr.mxu0 0.0
  %421 = vmatpush1.msra.mxu0 0.0
  %422 = vmatprep.subr.mxu0 0.0
  %423 = vmatpush1.msra.mxu0 0.0
  %424 = vmatprep.subr.mxu0 0.0
  %425 = vmatpush1.msra.mxu0 0.0
  %426 = vmatprep.subr.mxu0 0.0
  %427 = vmatpush1.msra.mxu0 0.0
  %428 = vmatprep.subr.mxu0 0.0
  %429 = vmatpush1.msra.mxu0 0.0
  %430 = vmatprep.subr.mxu0 0.0
  %431 = vmatpush1.msra.mxu0 0.0
  %432 = vmatprep.subr.mxu0 0.0
  %433 = vmatpush1.msra.mxu0 0.0
  %434 = vmatprep.subr.mxu0 0.0
  %435 = vmatpush1.msra.mxu0 0.0
  %436 = vmatprep.subr.mxu0 0.0
  %437 = vmatpush1.msra.mxu0 0.0
  %438 = vmatprep.subr.mxu0 0.0
  %439 = vmatpush1.msra.mxu0 0.0
  %440 = vmatprep.subr.mxu0 0.0
  %441 = vmatpush1.msra.mxu0 0.0
  %442 = vmatprep.subr.mxu0 0.0
  %443 = vmatpush1.msra.mxu0 0.0
  %444 = vmatprep.subr.mxu0 0.0
  %445 = vmatpush1.msra.mxu0 0.0
  %446 = vmatprep.subr.mxu0 0.0
  %447 = vmatpush1.msra.mxu0 0.0
  %448 = vmatprep.subr.mxu0 0.0
  %449 = vmatpush1.msra.mxu0 0.0
  %450 = vmatprep.subr.mxu0 0.0
  %451 = vmatpush1.msra.mxu0 0.0
  %452 = vmatprep.subr.mxu0 0.0
  %453 = vmatpush1.msra.mxu0 0.0
  %454 = vmatprep.subr.mxu0 0.0
  %455 = vmatpush1.msra.mxu0 0.0
  %456 = vmatprep.subr.mxu0 0.0
  %457 = vmatpush1.msra.mxu0 0.0
  %458 = vmatprep.subr.mxu0 0.0
  %459 = vmatpush1.msra.mxu0 0.0
  %460 = vmatprep.subr.mxu0 0.0
  %461 = vmatpush1.msra.mxu0 0.0
  %462 = vmatprep.subr.mxu0 0.0
  %463 = vmatpush1.msra.mxu0 0.0
  %464 = vmatprep.mubr.f32.mxu0 0.0
  %465 = vmatmul.mubr.f32.gmra.mrb[0].mxu0 %v398
  %v466 = vpop.f32.mrb[0].mxu0
  %v467 = vadd.f32 0.0, %v466
  %v468 = vpop.f32.mrb[0].mxu0
  %469 = vdwg.mxu0
  %v470 = vadd.f32 %v394, %v467
  %v471 = vtanh.pop %v470
  %v472 = vmul.f32 %v471, %v29
  %v473 = vadd.f32 %v472, %v30
  %v474 = vmul.f32 %v473, %v386
  %476 = vrot.lane.b32.xlu0 %v473, 64
  %v477 = vpop.permute.xlu0 %476
  %v479 = vmul.f32 %v473, %v477
  %481 = vrot.lane.b32.xlu0 %v479, 32
  %v482 = vpop.permute.xlu0 %481
  %v484 = vadd.f32 %v474, %v482
  %v485 = vtanh.pop %v484
  %487 = vrot.lane.b32.xlu0 %v485, 64
  %v488 = vpop.permute.xlu0 %487
  %v490 = vmul.f32 %v473, %v488
  %s491 = scalar_lea.vmem [#allocation2], 24
  %v492 = vld [vmem:[%s491] sm:$0xff]
  %494 = vrot.lane.b32.xlu0 %v490, 32
  %v495 = vpop.permute.xlu0 %494
  %v496 = vsel %vm200, %v495, 0
  %498 = vmatprep.subr.mxu0 0.0
  %499 = vmatpush1.msra.mxu0 %v37
  %500 = vmatprep.subr.mxu0 0.0
  %501 = vmatpush1.msra.mxu0 %v38
  %502 = vmatprep.subr.mxu0 0.0
  %503 = vmatpush1.msra.mxu0 %v39
  %504 = vmatprep.subr.mxu0 0.0
  %505 = vmatpush1.msra.mxu0 %v40
  %506 = vmatprep.subr.mxu0 0.0
  %507 = vmatpush1.msra.mxu0 0.0
  %508 = vmatprep.subr.mxu0 0.0
  %509 = vmatpush1.msra.mxu0 0.0
  %510 = vmatprep.subr.mxu0 0.0
  %511 = vmatpush1.msra.mxu0 0.0
  %512 = vmatprep.subr.mxu0 0.0
  %513 = vmatpush1.msra.mxu0 0.0
  %514 = vmatprep.subr.mxu0 0.0
  %515 = vmatpush1.msra.mxu0 0.0
  %516 = vmatprep.subr.mxu0 0.0
  %517 = vmatpush1.msra.mxu0 0.0
  %518 = vmatprep.subr.mxu0 0.0
  %519 = vmatpush1.msra.mxu0 0.0
  %520 = vmatprep.subr.mxu0 0.0
  %521 = vmatpush1.msra.mxu0 0.0
  %522 = vmatprep.subr.mxu0 0.0
  %523 = vmatpush1.msra.mxu0 0.0
  %524 = vmatprep.subr.mxu0 0.0
  %525 = vmatpush1.msra.mxu0 0.0
  %526 = vmatprep.subr.mxu0 0.0
  %527 = vmatpush1.msra.mxu0 0.0
  %528 = vmatprep.subr.mxu0 0.0
  %529 = vmatpush1.msra.mxu0 0.0
  %530 = vmatprep.subr.mxu0 0.0
  %531 = vmatpush1.msra.mxu0 0.0
  %532 = vmatprep.subr.mxu0 0.0
  %533 = vmatpush1.msra.mxu0 0.0
  %534 = vmatprep.subr.mxu0 0.0
  %535 = vmatpush1.msra.mxu0 0.0
  %536 = vmatprep.subr.mxu0 0.0
  %537 = vmatpush1.msra.mxu0 0.0
  %538 = vmatprep.subr.mxu0 0.0
  %539 = vmatpush1.msra.mxu0 0.0
  %540 = vmatprep.subr.mxu0 0.0
  %541 = vmatpush1.msra.mxu0 0.0
  %542 = vmatprep.subr.mxu0 0.0
  %543 = vmatpush1.msra.mxu0 0.0
  %544 = vmatprep.subr.mxu0 0.0
  %545 = vmatpush1.msra.mxu0 0.0
  %546 = vmatprep.subr.mxu0 0.0
  %547 = vmatpush1.msra.mxu0 0.0
  %548 = vmatprep.subr.mxu0 0.0
  %549 = vmatpush1.msra.mxu0 0.0
  %550 = vmatprep.subr.mxu0 0.0
  %551 = vmatpush1.msra.mxu0 0.0
  %552 = vmatprep.subr.mxu0 0.0
  %553 = vmatpush1.msra.mxu0 0.0
  %554 = vmatprep.subr.mxu0 0.0
  %555 = vmatpush1.msra.mxu0 0.0
  %556 = vmatprep.subr.mxu0 0.0
  %557 = vmatpush1.msra.mxu0 0.0
  %558 = vmatprep.subr.mxu0 0.0
  %559 = vmatpush1.msra.mxu0 0.0
  %560 = vmatprep.subr.mxu0 0.0
  %561 = vmatpush1.msra.mxu0 0.0
  %562 = vmatprep.mubr.f32.mxu0 0.0
  %563 = vmatmul.mubr.f32.gmra.mrb[0].mxu0 %v496
  %v564 = vpop.f32.mrb[0].mxu0
  %v565 = vadd.f32 0.0, %v564
  %v566 = vpop.f32.mrb[0].mxu0
  %567 = vdwg.mxu0
  %v568 = vadd.f32 %v492, %v565
  %v569 = vtanh.pop %v568
  %v570 = vmul.f32 %v569, %v29
  %v571 = vadd.f32 %v570, %v30
  %v572 = vmul.f32 %v571, %v484
  %574 = vrot.lane.b32.xlu0 %v571, 64
  %v575 = vpop.permute.xlu0 %574
  %v577 = vmul.f32 %v571, %v575
  %579 = vrot.lane.b32.xlu0 %v577, 32
  %v580 = vpop.permute.xlu0 %579
  %v582 = vadd.f32 %v572, %v580
  %v583 = vtanh.pop %v582
  %585 = vrot.lane.b32.xlu0 %v583, 64
  %v586 = vpop.permute.xlu0 %585
  %v588 = vmul.f32 %v571, %v586
  %s589 = scalar_lea.vmem [#allocation2], 32
  %v590 = vld [vmem:[%s589] sm:$0xff]
  %592 = vrot.lane.b32.xlu0 %v588, 32
  %v593 = vpop.permute.xlu0 %592
  %v594 = vsel %vm200, %v593, 0
  %596 = vmatprep.subr.mxu0 0.0
  %597 = vmatpush1.msra.mxu0 %v37
  %598 = vmatprep.subr.mxu0 0.0
  %599 = vmatpush1.msra.mxu0 %v38
  %600 = vmatprep.subr.mxu0 0.0
  %601 = vmatpush1.msra.mxu0 %v39
  %602 = vmatprep.subr.mxu0 0.0
  %603 = vmatpush1.msra.mxu0 %v40
  %604 = vmatprep.subr.mxu0 0.0
  %605 = vmatpush1.msra.mxu0 0.0
  %606 = vmatprep.subr.mxu0 0.0
  %607 = vmatpush1.msra.mxu0 0.0
  %608 = vmatprep.subr.mxu0 0.0
  %609 = vmatpush1.msra.mxu0 0.0
  %610 = vmatprep.subr.mxu0 0.0
  %611 = vmatpush1.msra.mxu0 0.0
  %612 = vmatprep.subr.mxu0 0.0
  %613 = vmatpush1.msra.mxu0 0.0
  %614 = vmatprep.subr.mxu0 0.0
  %615 = vmatpush1.msra.mxu0 0.0
  %616 = vmatprep.subr.mxu0 0.0
  %617 = vmatpush1.msra.mxu0 0.0
  %618 = vmatprep.subr.mxu0 0.0
  %619 = vmatpush1.msra.mxu0 0.0
  %620 = vmatprep.subr.mxu0 0.0
  %621 = vmatpush1.msra.mxu0 0.0
  %622 = vmatprep.subr.mxu0 0.0
  %623 = vmatpush1.msra.mxu0 0.0
  %624 = vmatprep.subr.mxu0 0.0
  %625 = vmatpush1.msra.mxu0 0.0
  %626 = vmatprep.subr.mxu0 0.0
  %627 = vmatpush1.msra.mxu0 0.0
  %628 = vmatprep.subr.mxu0 0.0
  %629 = vmatpush1.msra.mxu0 0.0
  %630 = vmatprep.subr.mxu0 0.0
  %631 = vmatpush1.msra.mxu0 0.0
  %632 = vmatprep.subr.mxu0 0.0
  %633 = vmatpush1.msra.mxu0 0.0
  %634 = vmatprep.subr.mxu0 0.0
  %635 = vmatpush1.msra.mxu0 0.0
  %636 = vmatprep.subr.mxu0 0.0
  %637 = vmatpush1.msra.mxu0 0.0
  %638 = vmatprep.subr.mxu0 0.0
  %639 = vmatpush1.msra.mxu0 0.0
  %640 = vmatprep.subr.mxu0 0.0
  %641 = vmatpush1.msra.mxu0 0.0
  %642 = vmatprep.subr.mxu0 0.0
  %643 = vmatpush1.msra.mxu0 0.0
  %644 = vmatprep.subr.mxu0 0.0
  %645 = vmatpush1.msra.mxu0 0.0
  %646 = vmatprep.subr.mxu0 0.0
  %647 = vmatpush1.msra.mxu0 0.0
  %648 = vmatprep.subr.mxu0 0.0
  %649 = vmatpush1.msra.mxu0 0.0
  %650 = vmatprep.subr.mxu0 0.0
  %651 = vmatpush1.msra.mxu0 0.0
  %652 = vmatprep.subr.mxu0 0.0
  %653 = vmatpush1.msra.mxu0 0.0
  %654 = vmatprep.subr.mxu0 0.0
  %655 = vmatpush1.msra.mxu0 0.0
  %656 = vmatprep.subr.mxu0 0.0
  %657 = vmatpush1.msra.mxu0 0.0
  %658 = vmatprep.subr.mxu0 0.0
  %659 = vmatpush1.msra.mxu0 0.0
  %660 = vmatprep.mubr.f32.mxu0 0.0
  %661 = vmatmul.mubr.f32.gmra.mrb[0].mxu0 %v594
  %v662 = vpop.f32.mrb[0].mxu0
  %v663 = vadd.f32 0.0, %v662
  %v664 = vpop.f32.mrb[0].mxu0
  %665 = vdwg.mxu0
  %v666 = vadd.f32 %v590, %v663
  %v667 = vtanh.pop %v666
  %v668 = vmul.f32 %v667, %v29
  %v669 = vadd.f32 %v668, %v30
  %v670 = vmul.f32 %v669, %v582
  %672 = vrot.lane.b32.xlu0 %v669, 64
  %v673 = vpop.permute.xlu0 %672
  %v675 = vmul.f32 %v669, %v673
  %677 = vrot.lane.b32.xlu0 %v675, 32
  %v678 = vpop.permute.xlu0 %677
  %v680 = vadd.f32 %v670, %v678
  %v681 = vtanh.pop %v680
  %683 = vrot.lane.b32.xlu0 %v681, 64
  %v684 = vpop.permute.xlu0 %683
  %v686 = vmul.f32 %v669, %v684
  %s687 = scalar_lea.vmem [#allocation2], 40
  %v688 = vld [vmem:[%s687] sm:$0xff]
  %690 = vrot.lane.b32.xlu0 %v686, 32
  %v691 = vpop.permute.xlu0 %690
  %v692 = vsel %vm200, %v691, 0
  %694 = vmatprep.subr.mxu0 0.0
  %695 = vmatpush1.msra.mxu0 %v37
  %696 = vmatprep.subr.mxu0 0.0
  %697 = vmatpush1.msra.mxu0 %v38
  %698 = vmatprep.subr.mxu0 0.0
  %699 = vmatpush1.msra.mxu0 %v39
  %700 = vmatprep.subr.mxu0 0.0
  %701 = vmatpush1.msra.mxu0 %v40
  %702 = vmatprep.subr.mxu0 0.0
  %703 = vmatpush1.msra.mxu0 0.0
  %704 = vmatprep.subr.mxu0 0.0
  %705 = vmatpush1.msra.mxu0 0.0
  %706 = vmatprep.subr.mxu0 0.0
  %707 = vmatpush1.msra.mxu0 0.0
  %708 = vmatprep.subr.mxu0 0.0
  %709 = vmatpush1.msra.mxu0 0.0
  %710 = vmatprep.subr.mxu0 0.0
  %711 = vmatpush1.msra.mxu0 0.0
  %712 = vmatprep.subr.mxu0 0.0
  %713 = vmatpush1.msra.mxu0 0.0
  %714 = vmatprep.subr.mxu0 0.0
  %715 = vmatpush1.msra.mxu0 0.0
  %716 = vmatprep.subr.mxu0 0.0
  %717 = vmatpush1.msra.mxu0 0.0
  %718 = vmatprep.subr.mxu0 0.0
  %719 = vmatpush1.msra.mxu0 0.0
  %720 = vmatprep.subr.mxu0 0.0
  %721 = vmatpush1.msra.mxu0 0.0
  %722 = vmatprep.subr.mxu0 0.0
  %723 = vmatpush1.msra.mxu0 0.0
  %724 = vmatprep.subr.mxu0 0.0
  %725 = vmatpush1.msra.mxu0 0.0
  %726 = vmatprep.subr.mxu0 0.0
  %727 = vmatpush1.msra.mxu0 0.0
  %728 = vmatprep.subr.mxu0 0.0
  %729 = vmatpush1.msra.mxu0 0.0
  %730 = vmatprep.subr.mxu0 0.0
  %731 = vmatpush1.msra.mxu0 0.0
  %732 = vmatprep.subr.mxu0 0.0
  %733 = vmatpush1.msra.mxu0 0.0
  %734 = vmatprep.subr.mxu0 0.0
  %735 = vmatpush1.msra.mxu0 0.0
  %736 = vmatprep.subr.mxu0 0.0
  %737 = vmatpush1.msra.mxu0 0.0
  %738 = vmatprep.subr.mxu0 0.0
  %739 = vmatpush1.msra.mxu0 0.0
  %740 = vmatprep.subr.mxu0 0.0
  %741 = vmatpush1.msra.mxu0 0.0
  %742 = vmatprep.subr.mxu0 0.0
  %743 = vmatpush1.msra.mxu0 0.0
  %744 = vmatprep.subr.mxu0 0.0
  %745 = vmatpush1.msra.mxu0 0.0
  %746 = vmatprep.subr.mxu0 0.0
  %747 = vmatpush1.msra.mxu0 0.0
  %748 = vmatprep.subr.mxu0 0.0
  %749 = vmatpush1.msra.mxu0 0.0
  %750 = vmatprep.subr.mxu0 0.0
  %751 = vmatpush1.msra.mxu0 0.0
  %752 = vmatprep.subr.mxu0 0.0
  %753 = vmatpush1.msra.mxu0 0.0
  %754 = vmatprep.subr.mxu0 0.0
  %755 = vmatpush1.msra.mxu0 0.0
  %756 = vmatprep.subr.mxu0 0.0
  %757 = vmatpush1.msra.mxu0 0.0
  %758 = vmatprep.mubr.f32.mxu0 0.0
  %759 = vmatmul.mubr.f32.gmra.mrb[0].mxu0 %v692
  %v760 = vpop.f32.mrb[0].mxu0
  %v761 = vadd.f32 0.0, %v760
  %v762 = vpop.f32.mrb[0].mxu0
  %763 = vdwg.mxu0
  %v764 = vadd.f32 %v688, %v761
  %v765 = vtanh.pop %v764
  %v766 = vmul.f32 %v765, %v29
  %v767 = vadd.f32 %v766, %v30
  %v768 = vmul.f32 %v767, %v680
  %770 = vrot.lane.b32.xlu0 %v767, 64
  %v771 = vpop.permute.xlu0 %770
  %v773 = vmul.f32 %v767, %v771
  %775 = vrot.lane.b32.xlu0 %v773, 32
  %v776 = vpop.permute.xlu0 %775
  %v778 = vadd.f32 %v768, %v776
  %v779 = vtanh.pop %v778
  %781 = vrot.lane.b32.xlu0 %v779, 64
  %v782 = vpop.permute.xlu0 %781
  %v784 = vmul.f32 %v767, %v782
  %s785 = scalar_lea.vmem [#allocation2], 48
  %v786 = vld [vmem:[%s785] sm:$0xff]
  %788 = vrot.lane.b32.xlu0 %v784, 32
  %v789 = vpop.permute.xlu0 %788
  %v790 = vsel %vm200, %v789, 0
  %792 = vmatprep.subr.mxu0 0.0
  %793 = vmatpush1.msra.mxu0 %v37
  %794 = vmatprep.subr.mxu0 0.0
  %795 = vmatpush1.msra.mxu0 %v38
  %796 = vmatprep.subr.mxu0 0.0
  %797 = vmatpush1.msra.mxu0 %v39
  %798 = vmatprep.subr.mxu0 0.0
  %799 = vmatpush1.msra.mxu0 %v40
  %800 = vmatprep.subr.mxu0 0.0
  %801 = vmatpush1.msra.mxu0 0.0
  %802 = vmatprep.subr.mxu0 0.0
  %803 = vmatpush1.msra.mxu0 0.0
  %804 = vmatprep.subr.mxu0 0.0
  %805 = vmatpush1.msra.mxu0 0.0
  %806 = vmatprep.subr.mxu0 0.0
  %807 = vmatpush1.msra.mxu0 0.0
  %808 = vmatprep.subr.mxu0 0.0
  %809 = vmatpush1.msra.mxu0 0.0
  %810 = vmatprep.subr.mxu0 0.0
  %811 = vmatpush1.msra.mxu0 0.0
  %812 = vmatprep.subr.mxu0 0.0
  %813 = vmatpush1.msra.mxu0 0.0
  %814 = vmatprep.subr.mxu0 0.0
  %815 = vmatpush1.msra.mxu0 0.0
  %816 = vmatprep.subr.mxu0 0.0
  %817 = vmatpush1.msra.mxu0 0.0
  %818 = vmatprep.subr.mxu0 0.0
  %819 = vmatpush1.msra.mxu0 0.0
  %820 = vmatprep.subr.mxu0 0.0
  %821 = vmatpush1.msra.mxu0 0.0
  %822 = vmatprep.subr.mxu0 0.0
  %823 = vmatpush1.msra.mxu0 0.0
  %824 = vmatprep.subr.mxu0 0.0
  %825 = vmatpush1.msra.mxu0 0.0
  %826 = vmatprep.subr.mxu0 0.0
  %827 = vmatpush1.msra.mxu0 0.0
  %828 = vmatprep.subr.mxu0 0.0
  %829 = vmatpush1.msra.mxu0 0.0
  %830 = vmatprep.subr.mxu0 0.0
  %831 = vmatpush1.msra.mxu0 0.0
  %832 = vmatprep.subr.mxu0 0.0
  %833 = vmatpush1.msra.mxu0 0.0
  %834 = vmatprep.subr.mxu0 0.0
  %835 = vmatpush1.msra.mxu0 0.0
  %836 = vmatprep.subr.mxu0 0.0
  %837 = vmatpush1.msra.mxu0 0.0
  %838 = vmatprep.subr.mxu0 0.0
  %839 = vmatpush1.msra.mxu0 0.0
  %840 = vmatprep.subr.mxu0 0.0
  %841 = vmatpush1.msra.mxu0 0.0
  %842 = vmatprep.subr.mxu0 0.0
  %843 = vmatpush1.msra.mxu0 0.0
  %844 = vmatprep.subr.mxu0 0.0
  %845 = vmatpush1.msra.mxu0 0.0
  %846 = vmatprep.subr.mxu0 0.0
  %847 = vmatpush1.msra.mxu0 0.0
  %848 = vmatprep.subr.mxu0 0.0
  %849 = vmatpush1.msra.mxu0 0.0
  %850 = vmatprep.subr.mxu0 0.0
  %851 = vmatpush1.msra.mxu0 0.0
  %852 = vmatprep.subr.mxu0 0.0
  %853 = vmatpush1.msra.mxu0 0.0
  %854 = vmatprep.subr.mxu0 0.0
  %855 = vmatpush1.msra.mxu0 0.0
  %856 = vmatprep.mubr.f32.mxu0 0.0
  %857 = vmatmul.mubr.f32.gmra.mrb[0].mxu0 %v790
  %v858 = vpop.f32.mrb[0].mxu0
  %v859 = vadd.f32 0.0, %v858
  %v860 = vpop.f32.mrb[0].mxu0
  %861 = vdwg.mxu0
  %v862 = vadd.f32 %v786, %v859
  %v863 = vtanh.pop %v862
  %v864 = vmul.f32 %v863, %v29
  %v865 = vadd.f32 %v864, %v30
  %v866 = vmul.f32 %v865, %v778
  %868 = vrot.lane.b32.xlu0 %v865, 64
  %v869 = vpop.permute.xlu0 %868
  %v871 = vmul.f32 %v865, %v869
  %873 = vrot.lane.b32.xlu0 %v871, 32
  %v874 = vpop.permute.xlu0 %873
  %v876 = vadd.f32 %v866, %v874
  %v877 = vtanh.pop %v876
  %879 = vrot.lane.b32.xlu0 %v877, 64
  %v880 = vpop.permute.xlu0 %879
  %v882 = vmul.f32 %v865, %v880
  %s883 = scalar_lea.vmem [#allocation2], 56
  %v884 = vld [vmem:[%s883] sm:$0xff]
  %886 = vrot.lane.b32.xlu0 %v882, 32
  %v887 = vpop.permute.xlu0 %886
  %v888 = vsel %vm200, %v887, 0
  %890 = vmatprep.subr.mxu0 0.0
  %891 = vmatpush1.msra.mxu0 %v37
  %892 = vmatprep.subr.mxu0 0.0
  %893 = vmatpush1.msra.mxu0 %v38
  %894 = vmatprep.subr.mxu0 0.0
  %895 = vmatpush1.msra.mxu0 %v39
  %896 = vmatprep.subr.mxu0 0.0
  %897 = vmatpush1.msra.mxu0 %v40
  %898 = vmatprep.subr.mxu0 0.0
  %899 = vmatpush1.msra.mxu0 0.0
  %900 = vmatprep.subr.mxu0 0.0
  %901 = vmatpush1.msra.mxu0 0.0
  %902 = vmatprep.subr.mxu0 0.0
  %903 = vmatpush1.msra.mxu0 0.0
  %904 = vmatprep.subr.mxu0 0.0
  %905 = vmatpush1.msra.mxu0 0.0
  %906 = vmatprep.subr.mxu0 0.0
  %907 = vmatpush1.msra.mxu0 0.0
  %908 = vmatprep.subr.mxu0 0.0
  %909 = vmatpush1.msra.mxu0 0.0
  %910 = vmatprep.subr.mxu0 0.0
  %911 = vmatpush1.msra.mxu0 0.0
  %912 = vmatprep.subr.mxu0 0.0
  %913 = vmatpush1.msra.mxu0 0.0
  %914 = vmatprep.subr.mxu0 0.0
  %915 = vmatpush1.msra.mxu0 0.0
  %916 = vmatprep.subr.mxu0 0.0
  %917 = vmatpush1.msra.mxu0 0.0
  %918 = vmatprep.subr.mxu0 0.0
  %919 = vmatpush1.msra.mxu0 0.0
  %920 = vmatprep.subr.mxu0 0.0
  %921 = vmatpush1.msra.mxu0 0.0
  %922 = vmatprep.subr.mxu0 0.0
  %923 = vmatpush1.msra.mxu0 0.0
  %924 = vmatprep.subr.mxu0 0.0
  %925 = vmatpush1.msra.mxu0 0.0
  %926 = vmatprep.subr.mxu0 0.0
  %927 = vmatpush1.msra.mxu0 0.0
  %928 = vmatprep.subr.mxu0 0.0
  %929 = vmatpush1.msra.mxu0 0.0
  %930 = vmatprep.subr.mxu0 0.0
  %931 = vmatpush1.msra.mxu0 0.0
  %932 = vmatprep.subr.mxu0 0.0
  %933 = vmatpush1.msra.mxu0 0.0
  %934 = vmatprep.subr.mxu0 0.0
  %935 = vmatpush1.msra.mxu0 0.0
  %936 = vmatprep.subr.mxu0 0.0
  %937 = vmatpush1.msra.mxu0 0.0
  %938 = vmatprep.subr.mxu0 0.0
  %939 = vmatpush1.msra.mxu0 0.0
  %940 = vmatprep.subr.mxu0 0.0
  %941 = vmatpush1.msra.mxu0 0.0
  %942 = vmatprep.subr.mxu0 0.0
  %943 = vmatpush1.msra.mxu0 0.0
  %944 = vmatprep.subr.mxu0 0.0
  %945 = vmatpush1.msra.mxu0 0.0
  %946 = vmatprep.subr.mxu0 0.0
  %947 = vmatpush1.msra.mxu0 0.0
  %948 = vmatprep.subr.mxu0 0.0
  %949 = vmatpush1.msra.mxu0 0.0
  %950 = vmatprep.subr.mxu0 0.0
  %951 = vmatpush1.msra.mxu0 0.0
  %952 = vmatprep.subr.mxu0 0.0
  %953 = vmatpush1.msra.mxu0 0.0
  %954 = vmatprep.mubr.f32.mxu0 0.0
  %955 = vmatmul.mubr.f32.gmra.mrb[0].mxu0 %v888
  %v956 = vpop.f32.mrb[0].mxu0
  %v957 = vadd.f32 0.0, %v956
  %v958 = vpop.f32.mrb[0].mxu0
  %959 = vdwg.mxu0
  %v960 = vadd.f32 %v884, %v957
  %v961 = vtanh.pop %v960
  %v962 = vmul.f32 %v961, %v29
  %v963 = vadd.f32 %v962, %v30
  %v964 = vmul.f32 %v963, %v876
  %966 = vrot.lane.b32.xlu0 %v963, 64
  %v967 = vpop.permute.xlu0 %966
  %v969 = vmul.f32 %v963, %v967
  %971 = vrot.lane.b32.xlu0 %v969, 32
  %v972 = vpop.permute.xlu0 %971
  %v974 = vadd.f32 %v964, %v972
  %v975 = vtanh.pop %v974
  %977 = vrot.lane.b32.xlu0 %v975, 64
  %v978 = vpop.permute.xlu0 %977
  %v980 = vmul.f32 %v963, %v978
  %v981 = vmax.f32 %v980, 0.0
  %v982 = vld [vmem:[%s4] sm:$0x1]
  %v984 = vlaneseq
  %v985 = vshrl.u32 %v984, 7
  %v986 = vsub.s32 0, %v985
  %v987 = vrot.slane %v982, %v986
  %988 = vrot.lane.b32.xlu0 %v987, 96
  %v989 = vpop.permute.xlu0 %988
  %v991 = vmul.f32 %v981, %v989
  %993 = vrot.lane.b32.xlu0 %v991, 32
  %v994 = vpop.permute.xlu0 %993
  %v996 = vsel %vm200, %v994, 0.0
  %997 = vadd.xlane.f32.xlu0 %v996
  %v998 = vpop.xlane.xlu0 %997
  %s999 = sld [smem:[#allocation3]]
  %v1000 = vstv %s999
  %v1001 = vadd.f32 %v998, %v1000
  %vm1002 = vcmask 7168
  %1003 = vst.msk [vmem:[%s6] sm:$0xff] %vm1002, %v1001
  // Predicated region
  $region26: #{tpu_custom_call.1} parent=0 // pred_check
    _
  $region27: #{tpu_custom_call.1} parent=0 // pred_check_branch
    %1005 = sbr.rel (0) target = $region29
  $region28: #{tpu_custom_call.1} parent=0 // pred_region
    _
  $region29: #{tpu_custom_call.1} parent=0 // pred_fallthru
    _
  // Predicated region
  $region30: #{tpu_custom_call.1} parent=0 // pred_check
    _
  $region31: #{tpu_custom_call.1} parent=0 // pred_check_branch
    %1007 = sbr.rel (0) target = $region33
  $region32: #{tpu_custom_call.1} parent=0 // pred_region
    _
  $region33: #{tpu_custom_call.1} parent=0 // pred_fallthru
    _

</llo_original>
